<compile_context>
chip_gen: v7x
topology: tpu7x:2x2x1
jax: 0.10.0
libtpu: 0.0.40
codegen_flags: <defaults>
</compile_context>

<pallas_src>
import functools

import jax
import jax.numpy as jnp
from jax.experimental import pallas as pl
from jax.experimental.pallas import tpu as pltpu

LEAKY_SLOPE = 0.01      # PyTorch F.leaky_relu default
MAX_BLOCK_ROWS = 4096   # (TM,128)-lane-padded f32 x tile = TM*512 B/buffer -> fits all gens


def classifier_kernel(x_ref, w1t_ref, b1t_ref, w2t_ref, b2_ref, o_ref):
    # x:   (TM, D)     batch tile (features on lanes)
    # w1t: (H, D)      fc1 weight, (out_features, in_features) -- resident
    # b1t: (H, 1)      fc1 bias as a column (broadcasts over the lane/batch axis)
    # w2t: (1, H)      fc2 weight row -- resident
    # b2:  (1, 1)      fc2 bias
    # o:   (1, 1, TM)  lane-dense sigmoid outputs for this batch tile
    x = x_ref[...]

    # fc1 in (features x batch) orientation: W1 @ x^T, contracting both
    # operands on the latent dimension (NT dot, same as the q @ k^T pattern).
    h = jax.lax.dot_general(
        w1t_ref[...], x,
        dimension_numbers=(((1,), (1,)), ((), ())),
        preferred_element_type=jnp.float32,
    )                                               # (H, TM)
    h = h + b1t_ref[...]                            # (H, 1) lane-broadcast
    h = jnp.where(h > 0, h, LEAKY_SLOPE * h)        # leaky_relu

    # fc2: (1, H) @ (H, TM) -> (1, TM); stays lane-dense.
    y = jnp.dot(w2t_ref[...], h, preferred_element_type=jnp.float32) + b2_ref[...]

    # sigmoid = 1 / (1 + exp(-y)); exp + approximate reciprocal on the EUP.
    o_ref[0] = pl.reciprocal(1.0 + jnp.exp(-y), approx=True)


def _round_up(n: int, m: int) -> int:
    return ((n + m - 1) // m) * m


@functools.partial(jax.jit, static_argnames=("block_rows",))
def classifier_forward(x, w1, b1, w2, b2, *, block_rows=None):
    """x: (B, D); w1: (D, H); b1: (1, H); w2: (H, 1); b2: (1, 1).  Returns (B, 1)."""
    B, D = x.shape
    H = w1.shape[1]
    assert w1.shape[0] == D

    if block_rows is None:
        # Largest batch tile that comfortably fits VMEM on every generation
        # (v7x has only 64 MiB physical).  Lane-padded x tile costs TM*512 B,
        # double-buffered; TM=4096 -> ~4 MiB total.
        block_rows = min(MAX_BLOCK_ROWS, _round_up(B, 128))
    tm = block_rows
    num_tiles = pl.cdiv(B, tm)   # ragged last tile handled by Pallas block padding

    # Tiny re-layouts (outside the kernel) into (features x batch) orientation.
    w1t = w1.T.astype(jnp.float32)                     # (H, D)
    b1t = jnp.reshape(b1, (H, 1)).astype(jnp.float32)  # (H, 1)
    w2t = jnp.reshape(w2, (1, H)).astype(jnp.float32)  # (1, H)
    b2r = jnp.reshape(b2, (1, 1)).astype(jnp.float32)  # (1, 1)

    out = pl.pallas_call(
        classifier_kernel,
        out_shape=jax.ShapeDtypeStruct((num_tiles, 1, tm), jnp.float32),
        grid=(num_tiles,),
        in_specs=[
            pl.BlockSpec((tm, D), lambda i: (i, 0)),   # x: streamed batch tiles
            pl.BlockSpec((H, D), lambda i: (0, 0)),    # weights/biases: resident
            pl.BlockSpec((H, 1), lambda i: (0, 0)),
            pl.BlockSpec((1, H), lambda i: (0, 0)),
            pl.BlockSpec((1, 1), lambda i: (0, 0)),
        ],
        out_specs=pl.BlockSpec((1, 1, tm), lambda i: (i, 0, 0)),
        compiler_params=pltpu.CompilerParams(
            dimension_semantics=("parallel",),          # independent batch tiles
            vmem_limit_bytes=32 * 1024 * 1024,          # > v5e's 16 MiB default
        ),
    )(x.astype(jnp.float32), w1t, b1t, w2t, b2r)

    # (num_tiles, 1, tm) -> (B, 1); rows beyond B (ragged last tile) are dropped.
    return out.reshape(num_tiles * tm)[:B].reshape(B, 1)


def init_params(key, latent_dim, hidden=10):
    # Deterministic init mimicking nn.Linear's uniform(-1/sqrt(fan_in), 1/sqrt(fan_in)).
    k1, k2, k3, k4 = jax.random.split(key, 4)
    lim1 = 1.0 / jnp.sqrt(latent_dim)
    lim2 = 1.0 / jnp.sqrt(float(hidden))
    # stored as (in, out) = W^T relative to PyTorch's (out, in)
    w1 = jax.random.uniform(k1, (latent_dim, hidden), jnp.float32, -lim1, lim1)
    b1 = jax.random.uniform(k2, (1, hidden), jnp.float32, -lim1, lim1)
    w2 = jax.random.uniform(k3, (hidden, 1), jnp.float32, -lim2, lim2)
    b2 = jax.random.uniform(k4, (1, 1), jnp.float32, -lim2, lim2)
    return w1, b1, w2, b2


if __name__ == "__main__":
    latent_dim = 32
    batch = 512        # small, but enough to exercise a multi-tile grid
    block_rows = 128   # -> 4 batch tiles

    key = jax.random.PRNGKey(0)
    kx, kp = jax.random.split(key)
    x = jax.random.normal(kx, (batch, latent_dim), jnp.float32)
    w1, b1, w2, b2 = init_params(kp, latent_dim)

    out = classifier_forward(x, w1, b1, w2, b2, block_rows=block_rows)
    out = jax.block_until_ready(out)

    # Pure-JAX reference check
    h_ref = x @ w1 + b1
    h_ref = jnp.where(h_ref > 0, h_ref, 0.01 * h_ref)
    ref = jax.nn.sigmoid(h_ref @ w2 + b2)

    assert out.shape == (batch, 1), out.shape
    # tolerance covers the approximate-reciprocal sigmoid (EUP vrcp)
    assert jnp.allclose(out, ref, atol=2e-3, rtol=2e-3), float(jnp.max(jnp.abs(out - ref)))

    print("KERNEL_OK")
</pallas_src>

<mosaic_0001>
module attributes {stable_mosaic.version = 11 : i64} {
  func.func @classifier_kernel(%arg0: i32, %arg1: memref<128x32xf32, #tpu.memory_space<vmem>>, %arg2: memref<10x32xf32, #tpu.memory_space<vmem>>, %arg3: memref<10x1xf32, #tpu.memory_space<vmem>>, %arg4: memref<1x10xf32, #tpu.memory_space<vmem>>, %arg5: memref<1x1xf32, #tpu.memory_space<vmem>>, %arg6: memref<1x1x128xf32, #tpu.memory_space<vmem>>) attributes {dimension_semantics = [#tpu.dimension_semantics<parallel>], iteration_bounds = array<i64: 4>, scalar_prefetch = 0 : i64, scratch_operands = 0 : i64, tpu.core_type = #tpu.core_type<tc>, window_params = [{transform_indices = @transform_0, window_bounds = array<i64: 128, 32>}, {pipeline_mode = #tpu.pipeline_mode<synchronous>, transform_indices = @transform_1, window_bounds = array<i64: 10, 32>}, {pipeline_mode = #tpu.pipeline_mode<synchronous>, transform_indices = @transform_2, window_bounds = array<i64: 10, 1>}, {pipeline_mode = #tpu.pipeline_mode<synchronous>, transform_indices = @transform_3, window_bounds = array<i64: 1, 10>}, {pipeline_mode = #tpu.pipeline_mode<synchronous>, transform_indices = @transform_4, window_bounds = array<i64: 1, 1>}, {transform_indices = @transform_5, window_bounds = array<i64: 1, 1, 128>}]} {
    %c0 = arith.constant 0 : index
    %c0_0 = arith.constant 0 : index
    %0 = vector.load %arg1[%c0, %c0_0] : memref<128x32xf32, #tpu.memory_space<vmem>>, vector<128x32xf32>
    %c0_1 = arith.constant 0 : index
    %c0_2 = arith.constant 0 : index
    %1 = vector.load %arg2[%c0_1, %c0_2] : memref<10x32xf32, #tpu.memory_space<vmem>>, vector<10x32xf32>
    %cst = arith.constant dense<0.000000e+00> : vector<10x128xf32>
    %2 = tpu.matmul %1, %0, %cst {dimension_numbers = #tpu.dot_dimension_numbers<[1], [1], [0], [0], [0, 0, 1, 0], [], []>} : vector<10x32xf32>, vector<128x32xf32>, vector<10x128xf32> -> vector<10x128xf32>
    %c0_3 = arith.constant 0 : index
    %c0_4 = arith.constant 0 : index
    %3 = vector.load %arg3[%c0_3, %c0_4] : memref<10x1xf32, #tpu.memory_space<vmem>>, vector<10x1xf32>
    %4 = vector.broadcast %3 : vector<10x1xf32> to vector<10x128xf32>
    %5 = arith.addf %2, %4 : vector<10x128xf32>
    %cst_5 = arith.constant 0.000000e+00 : f32
    %6 = vector.broadcast %cst_5 : f32 to vector<10x128xf32>
    %7 = arith.cmpf ogt, %5, %6 : vector<10x128xf32>
    %cst_6 = arith.constant 0.00999999977 : f32
    %8 = vector.broadcast %cst_6 : f32 to vector<10x128xf32>
    %9 = arith.mulf %8, %5 : vector<10x128xf32>
    %10 = arith.select %7, %5, %9 : vector<10x128xi1>, vector<10x128xf32>
    %c0_7 = arith.constant 0 : index
    %c0_8 = arith.constant 0 : index
    %11 = vector.load %arg4[%c0_7, %c0_8] : memref<1x10xf32, #tpu.memory_space<vmem>>, vector<1x10xf32>
    %cst_9 = arith.constant dense<0.000000e+00> : vector<1x128xf32>
    %12 = tpu.matmul %11, %10, %cst_9 {dimension_numbers = #tpu.dot_dimension_numbers<[1], [0], [0], [1], [0, 0, 1, 1], [], []>} : vector<1x10xf32>, vector<10x128xf32>, vector<1x128xf32> -> vector<1x128xf32>
    %c0_10 = arith.constant 0 : index
    %c0_11 = arith.constant 0 : index
    %13 = vector.load %arg5[%c0_10, %c0_11] : memref<1x1xf32, #tpu.memory_space<vmem>>, vector<1x1xf32>
    %14 = vector.broadcast %13 : vector<1x1xf32> to vector<1x128xf32>
    %15 = arith.addf %12, %14 : vector<1x128xf32>
    %cst_12 = arith.constant 0.000000e+00 : f32
    %16 = vector.broadcast %cst_12 : f32 to vector<1x128xf32>
    %17 = arith.subf %16, %15 : vector<1x128xf32>
    %18 = math.exp %17 : vector<1x128xf32>
    %cst_13 = arith.constant 1.000000e+00 : f32
    %19 = vector.broadcast %cst_13 : f32 to vector<1x128xf32>
    %20 = arith.addf %19, %18 : vector<1x128xf32>
    %21 = tpu.reciprocal %20 {approx = true} : vector<1x128xf32> -> vector<1x128xf32>
    %c0_14 = arith.constant 0 : index
    %c0_15 = arith.constant 0 : index
    %c0_16 = arith.constant 0 : index
    %22 = vector.load %arg6[%c0_14, %c0_15, %c0_16] : memref<1x1x128xf32, #tpu.memory_space<vmem>>, vector<1x1x128xf32>
    %23 = vector.shape_cast %22 : vector<1x1x128xf32> to vector<1x128xf32>
    %24 = vector.shape_cast %21 : vector<1x128xf32> to vector<1x1x128xf32>
    tpu.vector_store %arg6[%c0_14, %c0_15, %c0_16], %24 {strides = array<i32>} : memref<1x1x128xf32, #tpu.memory_space<vmem>>, vector<1x1x128xf32>,
    return
  }
  func.func @transform_0(%arg0: i32) -> (i32, i32) {
    %c0_i32 = arith.constant 0 : i32
    %c0_i32_0 = arith.constant 0 : i32
    return %arg0, %c0_i32 : i32, i32
  }
  func.func @transform_1(%arg0: i32) -> (i32, i32) {
    %c0_i32 = arith.constant 0 : i32
    %c0_i32_0 = arith.constant 0 : i32
    %c0_i32_1 = arith.constant 0 : i32
    return %c0_i32, %c0_i32_0 : i32, i32
  }
  func.func @transform_2(%arg0: i32) -> (i32, i32) {
    %c0_i32 = arith.constant 0 : i32
    %c0_i32_0 = arith.constant 0 : i32
    %c0_i32_1 = arith.constant 0 : i32
    return %c0_i32, %c0_i32_0 : i32, i32
  }
  func.func @transform_3(%arg0: i32) -> (i32, i32) {
    %c0_i32 = arith.constant 0 : i32
    %c0_i32_0 = arith.constant 0 : i32
    %c0_i32_1 = arith.constant 0 : i32
    return %c0_i32, %c0_i32_0 : i32, i32
  }
  func.func @transform_4(%arg0: i32) -> (i32, i32) {
    %c0_i32 = arith.constant 0 : i32
    %c0_i32_0 = arith.constant 0 : i32
    %c0_i32_1 = arith.constant 0 : i32
    return %c0_i32, %c0_i32_0 : i32, i32
  }
  func.func @transform_5(%arg0: i32) -> (i32, i32, i32) {
    %c0_i32 = arith.constant 0 : i32
    %c0_i32_0 = arith.constant 0 : i32
    %c0_i32_1 = arith.constant 0 : i32
    return %arg0, %c0_i32, %c0_i32_0 : i32, i32, i32
  }
}

</mosaic_0001>

<llo_original>
// kernel: classifier_forward.1
$region0: #{classifier_forward.1}
  #allocation0 [shape = 'u32[]', space=smem, size = 0x4, offset = 0x4, fixed_abs, tag = 'smem constant byte address 0x4 - core index']
  #allocation1 [shape = 'u32[144,128]{1,0:T(1,128)}', space=vmem, size = 0x12000, scoped, tag = 'internal scratch']
  #allocation2 [shape = 'f32[1,1]{1,0:T(1,128)S(1)}', space=vmem, size = 0x200, scoped, tag = 'scoped memory for classifier_forward.1']
  %s0 = inlined_call_operand.vmem [shape: f32[512,32], index: 0, kind: input, shape index: {}]
  %s1 = inlined_call_operand.vmem [shape: f32[10,32], index: 1, kind: input, shape index: {}]
  %s2 = inlined_call_operand.vmem [shape: f32[10,1], index: 2, kind: input, shape index: {}]
  %s3 = inlined_call_operand.vmem [shape: f32[1,10], index: 3, kind: input, shape index: {}]
  %s4 = inlined_call_operand.<no memory space> [shape: f32[1,1], index: 4, kind: input, shape index: {}]
  %s5 = inlined_call_operand.hbm [shape: f32[4,1,128], index: 5, kind: output, shape index: {}]
  %s6 = sld [smem:[#allocation0]]
  $region53: #{classifier_forward.1} parent=0
    _
  %s8 = ssub.s32 1, %s6
  %s9 = scalar_select 0, %s8, %s6
  %v10 = vstv %s4
  %11 = vst [vmem:[#allocation2] sm:$0x1] %v10
  $region1: #{classifier_forward.1} parent=0
    #allocation3 [shape = 'u8[1024]{0}', space=vmem, size = 0x400, scoped, tag = 'output window, operand 0']
    #allocation4 [shape = 's32[2]{0}', space=sflag, size = 0x8, scoped, tag = 'scoped memory for classifier_forward.1']
    %12 = vsyncpa [#allocation4], 0
    %s13 = scalar_lea.sflag [#allocation4], 1
    %14 = vsyncpa %s13, 0
    loop: start=0, step=1, limit=6
    $region2: #{classifier_forward.1} parent=1 // loop_pre_header
      _
    $region3: #{classifier_forward.1} parent=1 // loop_header
      %s16 = sphi 0, %s20
      %p17 = scmp.ge.s32.totalorder %s16, 6
      %s26 = sphi 0, %s28
      %s29 = sphi 0, %s26
      %s30 = sphi 0, %s29
      %s46 = sphi 0, %s30
      %s50 = sphi 0, %s50
      %s52 = sphi 0, %s50
      %s53 = sphi 0, %s52
      %s67 = sphi 0, %s53
      %s71 = sphi 0, %s71
      %s73 = sphi 0, %s71
      %s74 = sphi 0, %s73
      %s88 = sphi 0, %s74
      %s92 = sphi 0, %s92
      %s94 = sphi 0, %s92
      %s95 = sphi 0, %s94
      %s109 = sphi 0, %s95
      %s113 = sphi 0, %s113
      %s115 = sphi 0, %s113
      %s116 = sphi 0, %s115
      %s130 = sphi 0, %s116
      %s136 = sphi 0, %s138
      %s139 = sphi 0, %s136
      %s140 = sphi 0, %s139
      %s156 = sphi 0, %s140
    $region4: #{classifier_forward.1} parent=1 // loop_header_branch
      %19 = sbr.rel (%p17) target = $region8
    $region5: #{classifier_forward.1} parent=1 // loop_body
      %s21 = ssub.s32 %s16, 1
      %s22 = ssub.s32 %s16, 2
      %s23 = sadd.s32 %s16, 1
      %s24 = ssub.s32 %s16, %s23
      %p25 = scmp.eq.s32.totalorder %s24, 0
      %s27 = sadd.s32 %s26, 1
      %s28 = scalar_select %p25, %s26, %s27
      %p31 = pneg %p25
      %p32 = scmp.eq.s32.totalorder %s16, 3
      %p33 = por %p31, %p32
      %p34 = scmp.ne.s32.totalorder %s26, %s29
      %p35 = scmp.eq.s32.totalorder %s16, 0
      %p36 = por %p34, %p35
      %p37 = scmp.ne.s32.totalorder %s26, %s29
      %p38 = scmp.eq.s32.totalorder %s21, 3
      %p39 = por %p37, %p38
      %p40 = scmp.ne.s32.totalorder %s29, %s30
      %p41 = scmp.eq.s32.totalorder %s21, 0
      %p42 = por %p40, %p41
      %p43 = scmp.ne.s32.totalorder %s29, %s30
      %p44 = scmp.eq.s32.totalorder %s22, 3
      %p45 = por %p43, %p44
      %p47 = scmp.ne.s32.totalorder %s30, %s46
      %p48 = scmp.eq.s32.totalorder %s22, 0
      %p49 = por %p47, %p48
      %s51 = sadd.s32 %s50, 1
      %p54 = scmp.eq.s32.totalorder %s16, 3
      %p55 = scmp.ne.s32.totalorder %s50, %s52
      %p56 = scmp.eq.s32.totalorder %s16, 0
      %p57 = por %p55, %p56
      %p58 = scmp.ne.s32.totalorder %s50, %s52
      %p59 = scmp.eq.s32.totalorder %s21, 3
      %p60 = por %p58, %p59
      %p61 = scmp.ne.s32.totalorder %s52, %s53
      %p62 = scmp.eq.s32.totalorder %s21, 0
      %p63 = por %p61, %p62
      %p64 = scmp.ne.s32.totalorder %s52, %s53
      %p65 = scmp.eq.s32.totalorder %s22, 3
      %p66 = por %p64, %p65
      %p68 = scmp.ne.s32.totalorder %s53, %s67
      %p69 = scmp.eq.s32.totalorder %s22, 0
      %p70 = por %p68, %p69
      %s72 = sadd.s32 %s71, 1
      %p75 = scmp.eq.s32.totalorder %s16, 3
      %p76 = scmp.ne.s32.totalorder %s71, %s73
      %p77 = scmp.eq.s32.totalorder %s16, 0
      %p78 = por %p76, %p77
      %p79 = scmp.ne.s32.totalorder %s71, %s73
      %p80 = scmp.eq.s32.totalorder %s21, 3
      %p81 = por %p79, %p80
      %p82 = scmp.ne.s32.totalorder %s73, %s74
      %p83 = scmp.eq.s32.totalorder %s21, 0
      %p84 = por %p82, %p83
      %p85 = scmp.ne.s32.totalorder %s73, %s74
      %p86 = scmp.eq.s32.totalorder %s22, 3
      %p87 = por %p85, %p86
      %p89 = scmp.ne.s32.totalorder %s74, %s88
      %p90 = scmp.eq.s32.totalorder %s22, 0
      %p91 = por %p89, %p90
      %s93 = sadd.s32 %s92, 1
      %p96 = scmp.eq.s32.totalorder %s16, 3
      %p97 = scmp.ne.s32.totalorder %s92, %s94
      %p98 = scmp.eq.s32.totalorder %s16, 0
      %p99 = por %p97, %p98
      %p100 = scmp.ne.s32.totalorder %s92, %s94
      %p101 = scmp.eq.s32.totalorder %s21, 3
      %p102 = por %p100, %p101
      %p103 = scmp.ne.s32.totalorder %s94, %s95
      %p104 = scmp.eq.s32.totalorder %s21, 0
      %p105 = por %p103, %p104
      %p106 = scmp.ne.s32.totalorder %s94, %s95
      %p107 = scmp.eq.s32.totalorder %s22, 3
      %p108 = por %p106, %p107
      %p110 = scmp.ne.s32.totalorder %s95, %s109
      %p111 = scmp.eq.s32.totalorder %s22, 0
      %p112 = por %p110, %p111
      %s114 = sadd.s32 %s113, 1
      %p117 = scmp.eq.s32.totalorder %s16, 3
      %p118 = scmp.ne.s32.totalorder %s113, %s115
      %p119 = scmp.eq.s32.totalorder %s16, 0
      %p120 = por %p118, %p119
      %p121 = scmp.ne.s32.totalorder %s113, %s115
      %p122 = scmp.eq.s32.totalorder %s21, 3
      %p123 = por %p121, %p122
      %p124 = scmp.ne.s32.totalorder %s115, %s116
      %p125 = scmp.eq.s32.totalorder %s21, 0
      %p126 = por %p124, %p125
      %p127 = scmp.ne.s32.totalorder %s115, %s116
      %p128 = scmp.eq.s32.totalorder %s22, 3
      %p129 = por %p127, %p128
      %p131 = scmp.ne.s32.totalorder %s116, %s130
      %p132 = scmp.eq.s32.totalorder %s22, 0
      %p133 = por %p131, %p132
      %s134 = ssub.s32 %s16, %s23
      %p135 = scmp.eq.s32.totalorder %s134, 0
      %s137 = sadd.s32 %s136, 1
      %s138 = scalar_select %p135, %s136, %s137
      %p141 = pneg %p135
      %p142 = scmp.eq.s32.totalorder %s16, 3
      %p143 = por %p141, %p142
      %p144 = scmp.ne.s32.totalorder %s136, %s139
      %p145 = scmp.eq.s32.totalorder %s16, 0
      %p146 = por %p144, %p145
      %p147 = scmp.ne.s32.totalorder %s136, %s139
      %p148 = scmp.eq.s32.totalorder %s21, 3
      %p149 = por %p147, %p148
      %p150 = scmp.ne.s32.totalorder %s139, %s140
      %p151 = scmp.eq.s32.totalorder %s21, 0
      %p152 = por %p150, %p151
      %p153 = scmp.ne.s32.totalorder %s139, %s140
      %p154 = scmp.eq.s32.totalorder %s22, 3
      %p155 = por %p153, %p154
      %p157 = scmp.ne.s32.totalorder %s140, %s156
      %p158 = scmp.eq.s32.totalorder %s22, 0
      %p159 = por %p157, %p158
      %p160 = scmp.le.s32.totalorder 1, %s16
      %p161 = scmp.lt.s32.totalorder %s16, 5
      %p162 = pnand %p160, %p161
      %p163 = pneg %p162
      // Predicated region
      $region9: #{classifier_forward.1} parent=5 // pred_check
        _
      $region10: #{classifier_forward.1} parent=5 // pred_check_branch
        %165 = sbr.rel (%p162) target = $region12
      $region11: #{classifier_forward.1} parent=5 // pred_region
        %s166 = ssub.s32 %s16, 1
        // Predicated region
        $region13: #{classifier_forward.1} parent=11 // pred_check
          %p167 = pneg %p63
        $region14: #{classifier_forward.1} parent=11 // pred_check_branch
          %169 = sbr.rel (%p167) target = $region16
        $region15: #{classifier_forward.1} parent=11 // pred_region
          _
        $region16: #{classifier_forward.1} parent=11 // pred_fallthru
          _
        // Predicated region
        $region17: #{classifier_forward.1} parent=11 // pred_check
          %p170 = pneg %p84
        $region18: #{classifier_forward.1} parent=11 // pred_check_branch
          %172 = sbr.rel (%p170) target = $region20
        $region19: #{classifier_forward.1} parent=11 // pred_region
          _
        $region20: #{classifier_forward.1} parent=11 // pred_fallthru
          _
        // Predicated region
        $region21: #{classifier_forward.1} parent=11 // pred_check
          %p173 = pneg %p105
        $region22: #{classifier_forward.1} parent=11 // pred_check_branch
          %175 = sbr.rel (%p173) target = $region24
        $region23: #{classifier_forward.1} parent=11 // pred_region
          _
        $region24: #{classifier_forward.1} parent=11 // pred_fallthru
          _
        // Predicated region
        $region25: #{classifier_forward.1} parent=11 // pred_check
          %p176 = pneg %p126
        $region26: #{classifier_forward.1} parent=11 // pred_check_branch
          %178 = sbr.rel (%p176) target = $region28
        $region27: #{classifier_forward.1} parent=11 // pred_region
          _
        $region28: #{classifier_forward.1} parent=11 // pred_fallthru
          _
      $region12: #{classifier_forward.1} parent=5 // pred_fallthru
        _
      %p179 = scmp.lt.s32.totalorder %s16, 4
      // Predicated region
      $region29: #{classifier_forward.1} parent=5 // pred_check
        %p180 = pneg %p179
      $region30: #{classifier_forward.1} parent=5 // pred_check_branch
        %182 = sbr.rel (%p180) target = $region32
      $region31: #{classifier_forward.1} parent=5 // pred_region
        // Predicated region
        $region33: #{classifier_forward.1} parent=31 // pred_check
          %p183 = pneg %p36
        $region34: #{classifier_forward.1} parent=31 // pred_check_branch
          %185 = sbr.rel (%p183) target = $region36
        $region35: #{classifier_forward.1} parent=31 // pred_region
          %s186 = smul.u32 16, %s16
          %p187 = scmp.lt.s32.totalorder %s186, 63
          %s188 = scalar_select %p187, %s186, 63
          %s189 = smul.addr %s188, 8
          %s190 = scalar_lea.vmem %s0, %s189
          %s191 = smul.u32 16, %s16
        $region36: #{classifier_forward.1} parent=31 // pred_fallthru
          _
      $region32: #{classifier_forward.1} parent=5 // pred_fallthru
        _
      %p192 = scmp.le.s32.totalorder 1, %s16
      %p193 = scmp.lt.s32.totalorder %s16, 5
      %p194 = pnand %p192, %p193
      %p195 = pneg %p194
      // Predicated region
      $region37: #{classifier_forward.1} parent=5 // pred_check
        _
      $region38: #{classifier_forward.1} parent=5 // pred_check_branch
        %197 = sbr.rel (%p194) target = $region40
      $region39: #{classifier_forward.1} parent=5 // pred_region
        %s198 = ssub.s32 %s16, 1
        %s199 = smul.u32 16, %s21
        %p200 = scmp.lt.s32.totalorder %s199, 63
        %s201 = scalar_select %p200, %s199, 63
        %s202 = smul.addr %s201, 8
        %s203 = scalar_lea.vmem %s0, %s202
        %p204 = pneg %p42
        %p205 = pneg %p39
        %p206 = pneg %p63
        %p207 = pneg %p60
        %p208 = pneg %p84
        %p209 = pneg %p81
        %p210 = pneg %p105
        %p211 = pneg %p102
        %p212 = pneg %p126
        %p213 = pneg %p123
        %p214 = pneg %p152
        %p215 = pneg %p149
        %s216 = sand.u32 %s139, 1
        %s217 = scalar_lea.sflag [#allocation4], %s216
        %s218 = sand.u32 %s139, 1
        %s219 = scalar_lea.vmem [#allocation3], %s218
        %s220 = smul.u32 16, %s21
        %p221 = scmp.lt.s32.totalorder %s220, 63
        %s222 = scalar_select %p221, %s220, 63
        %s223 = smul.addr %s222, 8
        %s224 = scalar_lea.vmem %s0, %s223
        %s225 = smul.u32 16, %s21
        %v226 = vld [vmem:[%s224] sm:$0xff]
        %v227 = vld [vmem:[%s224 + $0x8] sm:$0xff]
        %v228 = vld [vmem:[%s224 + $0x10] sm:$0xff]
        %v229 = vld [vmem:[%s224 + $0x18] sm:$0xff]
        %v230 = vld [vmem:[%s224 + $0x20] sm:$0xff]
        %v231 = vld [vmem:[%s224 + $0x28] sm:$0xff]
        %v232 = vld [vmem:[%s224 + $0x30] sm:$0xff]
        %v233 = vld [vmem:[%s224 + $0x38] sm:$0xff]
        %v234 = vld [vmem:[%s224 + $0x40] sm:$0xff]
        %v235 = vld [vmem:[%s224 + $0x48] sm:$0xff]
        %v236 = vld [vmem:[%s224 + $0x50] sm:$0xff]
        %v237 = vld [vmem:[%s224 + $0x58] sm:$0xff]
        %v238 = vld [vmem:[%s224 + $0x60] sm:$0xff]
        %v239 = vld [vmem:[%s224 + $0x68] sm:$0xff]
        %v240 = vld [vmem:[%s224 + $0x70] sm:$0xff]
        %v241 = vld [vmem:[%s224 + $0x78] sm:$0xff]
        %v242 = vld [vmem:[%s1] sm:$0xff]
        %v243 = vld [vmem:[%s1 + $0x8] sm:$0x3]
        %v244 = vld [vmem:[%s2] sm:$0xff]
        %v245 = vld [vmem:[%s2 + $0x8] sm:$0x3]
        %247 = vset.pattern.permute.xlu0 0
        %248 = vperm.xlu0 %247, %v244
        %v249 = vpop.permute.xlu0 %248
        %252 = vset.pattern.permute.xlu0 0
        %253 = vperm.xlu0 %252, %v245
        %v254 = vpop.permute.xlu0 %253
        %vm256 = vcmask 261120
        %v258 = vsel %vm256, %v242, 0
        %v261 = vsel %vm256, %v243, 0
        %v264 = vsel %vm256, %v226, 0
        %v267 = vsel %vm256, %v227, 0
        %v270 = vsel %vm256, %v228, 0
        %v273 = vsel %vm256, %v229, 0
        %v276 = vsel %vm256, %v230, 0
        %v279 = vsel %vm256, %v231, 0
        %v282 = vsel %vm256, %v232, 0
        %v285 = vsel %vm256, %v233, 0
        %v288 = vsel %vm256, %v234, 0
        %v291 = vsel %vm256, %v235, 0
        %v294 = vsel %vm256, %v236, 0
        %v297 = vsel %vm256, %v237, 0
        %v300 = vsel %vm256, %v238, 0
        %v303 = vsel %vm256, %v239, 0
        %v306 = vsel %vm256, %v240, 0
        %v309 = vsel %vm256, %v241, 0
        %311 = vmatprep.subr.mxu0 0.0
        %312 = vmatpush1.xpose.msra.mxu0 %v264
        %313 = vmatprep.subr.mxu0 0.0
        %314 = vmatpush1.xpose.msra.mxu0 %v267
        %315 = vmatprep.subr.mxu0 0.0
        %316 = vmatpush1.xpose.msra.mxu0 %v270
        %317 = vmatprep.subr.mxu0 0.0
        %318 = vmatpush1.xpose.msra.mxu0 %v273
        %319 = vmatprep.subr.mxu0 0.0
        %320 = vmatpush1.xpose.msra.mxu0 %v276
        %321 = vmatprep.subr.mxu0 0.0
        %322 = vmatpush1.xpose.msra.mxu0 %v279
        %323 = vmatprep.subr.mxu0 0.0
        %324 = vmatpush1.xpose.msra.mxu0 %v282
        %325 = vmatprep.subr.mxu0 0.0
        %326 = vmatpush1.xpose.msra.mxu0 %v285
        %327 = vmatprep.subr.mxu0 0.0
        %328 = vmatpush1.xpose.msra.mxu0 %v288
        %329 = vmatprep.subr.mxu0 0.0
        %330 = vmatpush1.xpose.msra.mxu0 %v291
        %331 = vmatprep.subr.mxu0 0.0
        %332 = vmatpush1.xpose.msra.mxu0 %v294
        %333 = vmatprep.subr.mxu0 0.0
        %334 = vmatpush1.xpose.msra.mxu0 %v297
        %335 = vmatprep.subr.mxu0 0.0
        %336 = vmatpush1.xpose.msra.mxu0 %v300
        %337 = vmatprep.subr.mxu0 0.0
        %338 = vmatpush1.xpose.msra.mxu0 %v303
        %339 = vmatprep.subr.mxu0 0.0
        %340 = vmatpush1.xpose.msra.mxu0 %v306
        %341 = vmatprep.subr.mxu0 0.0
        %342 = vmatpush1.xpose.msra.mxu0 %v309
        %343 = vmatprep.subr.mxu0 0.0
        %344 = vmatpush1.xpose.msra.mxu0 0.0
        %345 = vmatprep.subr.mxu0 0.0
        %346 = vmatpush1.xpose.msra.mxu0 0.0
        %347 = vmatprep.subr.mxu0 0.0
        %348 = vmatpush1.xpose.msra.mxu0 0.0
        %349 = vmatprep.subr.mxu0 0.0
        %350 = vmatpush1.xpose.msra.mxu0 0.0
        %351 = vmatprep.subr.mxu0 0.0
        %352 = vmatpush1.xpose.msra.mxu0 0.0
        %353 = vmatprep.subr.mxu0 0.0
        %354 = vmatpush1.xpose.msra.mxu0 0.0
        %355 = vmatprep.subr.mxu0 0.0
        %356 = vmatpush1.xpose.msra.mxu0 0.0
        %357 = vmatprep.subr.mxu0 0.0
        %358 = vmatpush1.xpose.msra.mxu0 0.0
        %359 = vmatprep.subr.mxu0 0.0
        %360 = vmatpush1.xpose.msra.mxu0 0.0
        %361 = vmatprep.subr.mxu0 0.0
        %362 = vmatpush1.xpose.msra.mxu0 0.0
        %363 = vmatprep.subr.mxu0 0.0
        %364 = vmatpush1.xpose.msra.mxu0 0.0
        %365 = vmatprep.subr.mxu0 0.0
        %366 = vmatpush1.xpose.msra.mxu0 0.0
        %367 = vmatprep.subr.mxu0 0.0
        %368 = vmatpush1.xpose.msra.mxu0 0.0
        %369 = vmatprep.subr.mxu0 0.0
        %370 = vmatpush1.xpose.msra.mxu0 0.0
        %371 = vmatprep.subr.mxu0 0.0
        %372 = vmatpush1.xpose.msra.mxu0 0.0
        %373 = vmatprep.subr.mxu0 0.0
        %374 = vmatpush1.xpose.msra.mxu0 0.0
        %375 = vmatprep.mubr.f32.mxu0 0.0
        %376 = vmatmul.mubr.f32.gmra.mrb[0].mxu0 %v258
        %v377 = vpop.f32.mrb[0].mxu0
        %v378 = vadd.f32 %v249, %v377
        %v379 = vpop.f32.mrb[0].mxu0
        %380 = vmatprep.mubr.f32.mxu0 0.0
        %381 = vmatmul.mubr.f32.gmra.mrb[0].mxu0 %v261
        %v382 = vpop.f32.mrb[0].mxu0
        %v383 = vadd.f32 %v254, %v382
        %v384 = vpop.f32.mrb[0].mxu0
        %385 = vdwg.mxu0
        %vm386 = vcmp.gt.f32.partialorder %v378, 0.0
        %vm387 = vcmp.gt.f32.partialorder %v383, 0.0
        %v388 = vmul.f32 %v378, 0.01
        %v389 = vmul.f32 %v383, 0.01
        %v390 = vsel %vm386, %v378, %v388
        %v391 = vsel %vm387, %v383, %v389
        %v392 = vld [vmem:[%s3] sm:$0x1]
        %v393 = vld [vmem:[#allocation2] sm:$0x1]
        %395 = vset.pattern.permute.xlu0 0
        %396 = vperm.xlu0 %395, %v393
        %v397 = vpop.permute.xlu0 %396
        %v399 = vlaneseq
        %v400 = vshrl.u32 %v399, 7
        %v401 = vsub.s32 0, %v400
        %v402 = vrot.slane %v397, %v401
        %vm403 = vcmask 80896
        %v405 = vsel %vm403, %v392, 0
        %vm407 = vcmask 1041408
        %v409 = vsel %vm407, %v391, 0
        %411 = vmatprep.subr.mxu0 0.0
        %412 = vmatpush1.msra.mxu0 %v390
        %413 = vmatprep.subr.mxu0 0.0
        %414 = vmatpush1.msra.mxu0 %v409
        %415 = vmatprep.subr.mxu0 0.0
        %416 = vmatpush1.msra.mxu0 0.0
        %417 = vmatprep.subr.mxu0 0.0
        %418 = vmatpush1.msra.mxu0 0.0
        %419 = vmatprep.subr.mxu0 0.0
        %420 = vmatpush1.msra.mxu0 0.0
        %421 = vmatprep.subr.mxu0 0.0
        %422 = vmatpush1.msra.mxu0 0.0
        %423 = vmatprep.subr.mxu0 0.0
        %424 = vmatpush1.msra.mxu0 0.0
        %425 = vmatprep.subr.mxu0 0.0
        %426 = vmatpush1.msra.mxu0 0.0
        %427 = vmatprep.subr.mxu0 0.0
        %428 = vmatpush1.msra.mxu0 0.0
        %429 = vmatprep.subr.mxu0 0.0
        %430 = vmatpush1.msra.mxu0 0.0
        %431 = vmatprep.subr.mxu0 0.0
        %432 = vmatpush1.msra.mxu0 0.0
        %433 = vmatprep.subr.mxu0 0.0
        %434 = vmatpush1.msra.mxu0 0.0
        %435 = vmatprep.subr.mxu0 0.0
        %436 = vmatpush1.msra.mxu0 0.0
        %437 = vmatprep.subr.mxu0 0.0
        %438 = vmatpush1.msra.mxu0 0.0
        %439 = vmatprep.subr.mxu0 0.0
        %440 = vmatpush1.msra.mxu0 0.0
        %441 = vmatprep.subr.mxu0 0.0
        %442 = vmatpush1.msra.mxu0 0.0
        %443 = vmatprep.subr.mxu0 0.0
        %444 = vmatpush1.msra.mxu0 0.0
        %445 = vmatprep.subr.mxu0 0.0
        %446 = vmatpush1.msra.mxu0 0.0
        %447 = vmatprep.subr.mxu0 0.0
        %448 = vmatpush1.msra.mxu0 0.0
        %449 = vmatprep.subr.mxu0 0.0
        %450 = vmatpush1.msra.mxu0 0.0
        %451 = vmatprep.subr.mxu0 0.0
        %452 = vmatpush1.msra.mxu0 0.0
        %453 = vmatprep.subr.mxu0 0.0
        %454 = vmatpush1.msra.mxu0 0.0
        %455 = vmatprep.subr.mxu0 0.0
        %456 = vmatpush1.msra.mxu0 0.0
        %457 = vmatprep.subr.mxu0 0.0
        %458 = vmatpush1.msra.mxu0 0.0
        %459 = vmatprep.subr.mxu0 0.0
        %460 = vmatpush1.msra.mxu0 0.0
        %461 = vmatprep.subr.mxu0 0.0
        %462 = vmatpush1.msra.mxu0 0.0
        %463 = vmatprep.subr.mxu0 0.0
        %464 = vmatpush1.msra.mxu0 0.0
        %465 = vmatprep.subr.mxu0 0.0
        %466 = vmatpush1.msra.mxu0 0.0
        %467 = vmatprep.subr.mxu0 0.0
        %468 = vmatpush1.msra.mxu0 0.0
        %469 = vmatprep.subr.mxu0 0.0
        %470 = vmatpush1.msra.mxu0 0.0
        %471 = vmatprep.subr.mxu0 0.0
        %472 = vmatpush1.msra.mxu0 0.0
        %473 = vmatprep.subr.mxu0 0.0
        %474 = vmatpush1.msra.mxu0 0.0
        %475 = vmatprep.mubr.f32.mxu0 0.0
        %476 = vmatmul.mubr.f32.gmra.mrb[0].mxu0 %v405
        %v477 = vpop.f32.mrb[0].mxu0
        %v478 = vadd.f32 %v402, %v477
        %v479 = vpop.f32.mrb[0].mxu0
        %480 = vdwg.mxu0
        %v481 = vsub.f32 0.0, %v478
        %v482 = vmul.f32 %v481, 1.442695
        %v483 = vpow.pop %v482
        %v484 = vadd.f32 %v483, 1.0
        %v485 = vrcp.pop %v484
        %486 = vst [vmem:[%s219] sm:$0x1] %v485
        %s487 = sand.u32 %s139, 1
        %s488 = scalar_lea.sflag [#allocation4], %s487
        %s489 = sand.u32 %s139, 1
        %s490 = scalar_lea.vmem [#allocation3], %s489
        // Predicated region
        $region41: #{classifier_forward.1} parent=39 // pred_check
          %p491 = pneg %p149
        $region42: #{classifier_forward.1} parent=39 // pred_check_branch
          %493 = sbr.rel (%p491) target = $region44
        $region43: #{classifier_forward.1} parent=39 // pred_region
          %s495 = ssub.s32 16, 16
          %496 = vsyncadd %s488, %s495
          %s497 = smul.addr %s21, 16
          %s498 = scalar_lea.hbm %s5, %s497
          %s500 = sshll.u32 %s490, 4
          %s501 = int_to_ptr.vmem [resolvable:$true] %s500
          %503 = dma.vmem_to_hbm [thread:$0]  %s501, 16, %s498, %s488
        $region44: #{classifier_forward.1} parent=39 // pred_fallthru
          _
      $region40: #{classifier_forward.1} parent=5 // pred_fallthru
        _
      %p504 = scmp.le.s32.totalorder 2, %s16
      // Predicated region
      $region45: #{classifier_forward.1} parent=5 // pred_check
        %p505 = pneg %p504
      $region46: #{classifier_forward.1} parent=5 // pred_check_branch
        %507 = sbr.rel (%p505) target = $region48
      $region47: #{classifier_forward.1} parent=5 // pred_region
        %s508 = ssub.s32 %s16, 2
        // Predicated region
        $region49: #{classifier_forward.1} parent=47 // pred_check
          %p509 = pneg %p155
        $region50: #{classifier_forward.1} parent=47 // pred_check_branch
          %511 = sbr.rel (%p509) target = $region52
        $region51: #{classifier_forward.1} parent=47 // pred_region
          %s512 = sand.u32 %s140, 1
          %s513 = scalar_lea.sflag [#allocation4], %s512
          %s514 = sand.u32 %s140, 1
          %s515 = scalar_lea.vmem [#allocation3], %s514
          %516 = dma.done %s513, 16
        $region52: #{classifier_forward.1} parent=47 // pred_fallthru
          _
      $region48: #{classifier_forward.1} parent=5 // pred_fallthru
        _
    $region6: #{classifier_forward.1} parent=1 // loop_footer
      %s20 = sadd.s32 1, %s16
    $region7: #{classifier_forward.1} parent=1 // loop_footer_branch
      %15 = sbr.rel target = $region3
    $region8: #{classifier_forward.1} parent=1 // loop_exit
      _
    %517 = vsyncpa [#allocation4], 1
    %s518 = scalar_lea.sflag [#allocation4], 1
    %519 = vsyncpa %s518, 1

</llo_original>
